<compile_context>
chip_gen: v7x
topology: tpu7x:2x2x1
jax: 0.10.0
libtpu: 0.0.40
codegen_flags: <defaults>
</compile_context>

<pallas_src>
import jax
import jax.numpy as jnp
from jax import lax
from jax.experimental import pallas as pl
from jax.experimental.pallas import tpu as pltpu


# ---------------------------------------------------------------------------
# Small helpers (generation-aware tiling / compiler params)
# ---------------------------------------------------------------------------

def _vmem_capacity_bytes():
    try:
        return int(pltpu.get_tpu_info().vmem_capacity_bytes)
    except Exception:
        return 64 * 1024 * 1024          # conservative (v7x-sized) default


def _pick_l_tile(lout, cin, cout, stride, q):
    """Length-axis tile: full Lout when it fits the generation cap, otherwise
    the largest 128-multiple whose double-buffered working set stays inside a
    healthy VMEM budget (4096 on 128 MiB v5e/v6e, 2048 on 64 MiB v7x)."""
    vmem = _vmem_capacity_bytes()
    cap = 4096 if vmem >= 100 * 1024 * 1024 else 2048
    if lout <= cap:
        return lout, 1
    qcin = q * cin
    budget = min(16 << 20, vmem // 6)

    def ws(t):
        return (4 * stride * cin * t * 2            # 2 halo blocks x double buffer
                + 2 * stride * cout * qcin * 2      # weights (assume 2 buffers)
                + 2 * cout * t * 2                  # output double buffer
                + cout * t * 4                      # f32 accumulator value
                + stride * qcin * t * 2)            # xcat assembly scratch

    tl = cap
    while tl > 256 and ws(tl) > budget:
        tl //= 2
    return tl, -(-lout // tl)


def _compiler_params(working_set_bytes, dim_sem):
    kwargs = dict(dimension_semantics=dim_sem)
    need = int(working_set_bytes) + (8 << 20)
    if need > (16 << 20):                       # only raise past scoped default
        cap = (_vmem_capacity_bytes() * 3) // 4
        kwargs["vmem_limit_bytes"] = int(min(need, cap))
    return pltpu.CompilerParams(**kwargs)


# ---------------------------------------------------------------------------
# Conv1d + bias + LeakyReLU(0.2), with the previous layer's PhaseShuffle
# folded into the input construction.
# ---------------------------------------------------------------------------

def conv1d_lrelu(x_ncl, w, b, *, stride, padding, in_shifts=None,
                 shift_factor=0, force_tl=None):
    """y = LeakyReLU(Conv1d(PhaseShuffle(x) if in_shifts else x) + b).

    x in NCL layout; in_shifts (per-batch int32 shifts) is the *pending*
    PhaseShuffle of the previous layer, applied here during the (single)
    host-side input construction so no separate shuffle pass is needed.
    """
    B, Cin, L = x_ncl.shape
    Cout, Cin_w, K = w.shape
    assert Cin_w == Cin
    Lout = (L + 2 * padding - K) // stride + 1
    Q = -(-K // stride)                       # taps per stride-phase
    QH = Q - 1                                # halo (columns) per phase

    if force_tl is not None and force_tl < Lout:
        TL, n_t = force_tl, -(-Lout // force_tl)
    else:
        TL, n_t = _pick_l_tile(Lout, Cin, Cout, stride, Q)
    Lout_pad = TL * n_t
    two_block = n_t > 1
    # Phase-array length: with length tiling we read the halo from the *next*
    # block (index_map t+1), so allocate one extra block of (zero) columns.
    Lph = (n_t + 1) * TL if two_block else (TL + QH)
    Lneed = Lph * stride

    # --- single host prepass: (PhaseShuffle) + conv zero-pad, then phase split
    x = x_ncl.astype(jnp.bfloat16)
    if in_shifts is None:
        pad_right = Lneed - (L + padding)
        assert pad_right >= 0
        conv_in = jnp.pad(x, ((0, 0), (0, 0), (padding, pad_right)))
    else:
        assert padding + L <= Lneed
        xr = jnp.pad(x, ((0, 0), (0, 0), (shift_factor, shift_factor)),
                     mode="reflect")

        def shift_and_pad(xb, s):
            win = lax.dynamic_slice_in_dim(xb, shift_factor - s, L, axis=-1)
            buf = jnp.zeros((Cin, Lneed), jnp.bfloat16)
            return lax.dynamic_update_slice(buf, win, (0, padding))

        conv_in = jax.vmap(shift_and_pad)(xr, in_shifts)

    # Stride-phase decomposition: phases[b, p, ci, m] = conv_in[b, ci, m*stride+p]
    # so tap k = q*stride + p of output l reads phases[b, p, ci, l+q]: every
    # in-kernel tap slice is a contiguous lane slice (no im2col HBM blow-up).
    # TODO(synk): this deinterleave is still one host pass; it could be folded
    # into the kernel with strided VMEM loads (pl.ds(stride=...)).
    phases = jnp.stack(
        [conv_in[:, :, p::stride][:, :, :Lph] for p in range(stride)], axis=1)

    # --- tap-fused weights: w_f[p, co, q*Cin+ci] = w[co, ci, q*stride+p]
    QCin = Q * Cin
    Kp = Q * stride
    w_pad = jnp.pad(w, ((0, 0), (0, 0), (0, Kp - K))) if Kp > K else w
    w_f = jnp.transpose(w_pad.reshape(Cout, Cin, Q, stride), (3, 0, 2, 1))
    w_f = w_f.reshape(stride, Cout, QCin).astype(jnp.bfloat16)
    b_c = b.reshape(Cout, 1).astype(jnp.float32)

    TLW = TL if two_block else (TL + QH)

    def kernel(*refs):
        if two_block:
            x_ref, xn_ref, w_ref, b_ref, o_ref, xcat_ref = refs
        else:
            x_ref, w_ref, b_ref, o_ref, xcat_ref = refs
            xn_ref = None
        # Assemble the (Q*Cin, TL) operand per phase, then `stride` matmuls
        # with contraction Q*Cin; accumulate in a local f32 value (no per-tap
        # VMEM accumulator round trip).
        for p in range(stride):
            for q in range(Q):
                rows = slice(q * Cin, (q + 1) * Cin)
                if q == 0:
                    xcat_ref[p, rows, :] = x_ref[p, :, 0:TL]
                elif two_block:
                    xcat_ref[p, rows, :TL - q] = x_ref[p, :, q:TL]
                    xcat_ref[p, rows, TL - q:] = xn_ref[p, :, 0:q]
                else:
                    xcat_ref[p, rows, :] = x_ref[p, :, q:q + TL]
        acc = None
        for p in range(stride):
            d = jnp.dot(w_ref[p], xcat_ref[p],
                        preferred_element_type=jnp.float32)
            acc = d if acc is None else acc + d
        y = acc + b_ref[...]                    # bias + LeakyReLU in f32
        o_ref[...] = jnp.where(y > 0.0, y, 0.2 * y).astype(o_ref.dtype)

    # --- specs
    if two_block:
        x_specs = [
            pl.BlockSpec((None, stride, Cin, TL), lambda bb, t: (bb, 0, 0, t)),
            pl.BlockSpec((None, stride, Cin, TL), lambda bb, t: (bb, 0, 0, t + 1)),
        ]
        x_args = (phases, phases)
    else:
        x_specs = [pl.BlockSpec((None, stride, Cin, TLW),
                                lambda bb, t: (bb, 0, 0, 0))]
        x_args = (phases,)

    w_bytes = stride * Cout * QCin * 2
    w_kwargs = {}
    if w_bytes > (1 << 20):
        # Constant index_map -> double buffering buys nothing; single-buffer
        # big deep-layer weights (critical on v7x's 64 MiB VMEM).
        w_kwargs = dict(pipeline_mode=pl.Buffered(1))
    w_spec = pl.BlockSpec((stride, Cout, QCin), lambda bb, t: (0, 0, 0),
                          **w_kwargs)
    b_spec = pl.BlockSpec((Cout, 1), lambda bb, t: (0, 0))

    n_wbuf = 1 if w_kwargs else 2
    working_set = (2 * len(x_specs) * stride * Cin * TLW * 2
                   + n_wbuf * w_bytes + 2 * Cout * 4
                   + 2 * Cout * TL * 2
                   + Cout * TL * 4
                   + stride * QCin * TL * 2)

    # TODO(synk): on v7x, for deep layers with B * n_t < 2 add a Cout-tiled
    # third grid axis so both TensorCores get work.
    out = pl.pallas_call(
        kernel,
        out_shape=jax.ShapeDtypeStruct((B, Cout, Lout_pad), jnp.bfloat16),
        grid=(B, n_t),
        in_specs=[*x_specs, w_spec, b_spec],
        out_specs=pl.BlockSpec((None, Cout, TL), lambda bb, t: (bb, 0, t)),
        scratch_shapes=[pltpu.VMEM((stride, QCin, TL), jnp.bfloat16)],
        compiler_params=_compiler_params(working_set, ("parallel", "parallel")),
    )(*x_args, w_f, b_c)

    return out[:, :, :Lout]


# ---------------------------------------------------------------------------
# PhaseShuffle (standalone; only used after the *last* conv layer)
# ---------------------------------------------------------------------------

def phase_shuffle(x_ncl, shifts, shift_factor):
    """out[b, c, t] = x[b, c, reflect(t - shifts[b])]  (WaveGAN PhaseShuffle)."""
    # TODO(synk): fold this last shuffle into the FC gather as well.
    if shift_factor <= 0:
        return x_ncl
    B, C, L = x_ncl.shape
    xr = jnp.pad(x_ncl, ((0, 0), (0, 0), (shift_factor, shift_factor)),
                 mode="reflect")

    def one(xb, k):
        return lax.dynamic_slice_in_dim(xb, shift_factor - k, L, axis=-1)

    return jax.vmap(one)(xr, shifts)


def _phase_shuffle_gather_ref(x_ncl, shifts):
    """Reference (gather-based) PhaseShuffle, used only for verification."""
    B, C, L = x_ncl.shape
    t = jnp.arange(L)

    def one(xb, k):
        s = t - k
        src = jnp.where(s < 0, -s, jnp.where(s > L - 1, 2 * (L - 1) - s, s))
        return jnp.take(xb, src, axis=-1)

    return jax.vmap(one)(x_ncl, shifts)


# ---------------------------------------------------------------------------
# Final Linear (out_features = 1): per-tile lane reduce into resident output
# ---------------------------------------------------------------------------

def fc(x_flat, w, b):
    # TODO(synk): could be fused into the last conv layer's epilogue so the
    # final activation never round-trips HBM.
    B, F = x_flat.shape
    TF = F if F <= 8192 else 8192
    Fp = -(-F // TF) * TF
    if Fp != F:
        x_flat = jnp.pad(x_flat, ((0, 0), (0, Fp - F)))
        w = jnp.pad(w, ((0, 0), (0, Fp - F)))
    n_f = Fp // TF
    xb = x_flat.astype(jnp.bfloat16)
    wf = w.astype(jnp.float32)
    b2 = b.reshape(1, 1).astype(jnp.float32)

    def kernel(x_ref, w_ref, b_ref, o_ref):
        j = pl.program_id(0)

        @pl.when(j == 0)
        def _init():
            o_ref[...] = jnp.zeros_like(o_ref)

        # Reduce this tile to (B, 1) on the XLU and accumulate into the
        # resident output block (no (B, TF) scratch).
        o_ref[...] += jnp.sum(x_ref[...].astype(jnp.float32) * w_ref[...],
                              axis=1, keepdims=True)

        @pl.when(j == pl.num_programs(0) - 1)
        def _finalize():
            o_ref[...] += b_ref[...]

    return pl.pallas_call(
        kernel,
        out_shape=jax.ShapeDtypeStruct((B, 1), jnp.float32),
        grid=(n_f,),
        in_specs=[pl.BlockSpec((B, TF), lambda j: (0, j)),
                  pl.BlockSpec((1, TF), lambda j: (0, j)),
                  pl.BlockSpec((1, 1), lambda j: (0, 0))],
        out_specs=pl.BlockSpec((B, 1), lambda j: (0, 0)),
        compiler_params=pltpu.CompilerParams(dimension_semantics=("arbitrary",)),
    )(xb, wf, b2)


# ---------------------------------------------------------------------------
# Model: params + forward (labels=None / n_classes=0 path)
# ---------------------------------------------------------------------------

def init_params(key, *, input_size, input_channels, n_layers, init_channels,
                kernel_size):
    params = {"convs": []}
    cin, cout = input_channels, init_channels
    keys = jax.random.split(key, 2 * n_layers + 2)
    for i in range(n_layers):
        w = 0.05 * jax.random.normal(keys[2 * i], (cout, cin, kernel_size),
                                     jnp.float32)
        b = 0.05 * jax.random.normal(keys[2 * i + 1], (cout,), jnp.float32)
        params["convs"].append((w, b))
        cin, cout = cout, cout * 2
    fc_in = cin * (input_size // (2 ** n_layers))
    params["fc_w"] = 0.05 * jax.random.normal(keys[-2], (1, fc_in), jnp.float32)
    params["fc_b"] = 0.05 * jax.random.normal(keys[-1], (1,), jnp.float32)
    return params


def _draw_shifts(key, n_layers, batch, shift_factor):
    if shift_factor <= 0:
        return [None] * n_layers
    keys = jax.random.split(key, n_layers)
    return [jax.random.randint(k, (batch,), -shift_factor, shift_factor + 1)
            for k in keys]


def wavegan_discriminator_forward(x, params, shuffle_key, *, kernel_size=16,
                                  stride=2, shift_factor=2, _force_tl=None):
    # TODO(synk): n_classes>0 conditional projection branch not implemented
    # (labels=None path only); spectral_norm (sp_norm=True) not implemented.
    padding = kernel_size // 2 - 1
    n_layers = len(params["convs"])
    shifts = _draw_shifts(shuffle_key, n_layers, x.shape[0], shift_factor)
    pending_shift = None                     # previous layer's PhaseShuffle
    for i, (w, b) in enumerate(params["convs"]):
        x = conv1d_lrelu(x, w, b, stride=stride, padding=padding,
                         in_shifts=pending_shift, shift_factor=shift_factor,
                         force_tl=_force_tl)
        pending_shift = shifts[i] if shift_factor > 0 else None
    if pending_shift is not None:            # last layer's shuffle before FC
        x = phase_shuffle(x, pending_shift, shift_factor)
    x_flat = x.reshape(x.shape[0], -1)       # NCL flatten == torch .view(B,-1)
    return fc(x_flat, params["fc_w"], params["fc_b"])


def reference_forward(x, params, shuffle_key, *, kernel_size=16, stride=2,
                      shift_factor=2):
    """Pure-XLA f32 reference mirroring the PyTorch module (for verification)."""
    padding = kernel_size // 2 - 1
    n_layers = len(params["convs"])
    shifts = _draw_shifts(shuffle_key, n_layers, x.shape[0], shift_factor)
    for i, (w, b) in enumerate(params["convs"]):
        y = lax.conv_general_dilated(
            x, w, (stride,), [(padding, padding)],
            dimension_numbers=("NCH", "OIH", "NCH"),
            precision=lax.Precision.HIGHEST)
        y = y + b[None, :, None]
        if shift_factor > 0:
            y = _phase_shuffle_gather_ref(y, shifts[i])
        x = jnp.where(y > 0, y, 0.2 * y)
    xf = x.reshape(x.shape[0], -1)
    return jnp.dot(xf, params["fc_w"].T,
                   precision=lax.Precision.HIGHEST) + params["fc_b"]


# ---------------------------------------------------------------------------

if __name__ == "__main__":
    K, STRIDE, SHIFT = 16, 2, 2

    def run_case(input_size, init_ch, n_layers, batch, force_tl=None):
        root = jax.random.PRNGKey(0)
        k_params, k_x, k_shuffle = jax.random.split(root, 3)
        params = init_params(k_params, input_size=input_size, input_channels=1,
                             n_layers=n_layers, init_channels=init_ch,
                             kernel_size=K)
        x = jax.random.normal(k_x, (batch, 1, input_size), jnp.float32)
        out = wavegan_discriminator_forward(x, params, k_shuffle, kernel_size=K,
                                            stride=STRIDE, shift_factor=SHIFT,
                                            _force_tl=force_tl)
        out = jax.block_until_ready(out)
        assert out.shape == (batch, 1), out.shape
        assert out.dtype == jnp.float32
        ref = jax.block_until_ready(
            reference_forward(x, params, k_shuffle, kernel_size=K,
                              stride=STRIDE, shift_factor=SHIFT))
        assert jnp.allclose(out, ref, atol=2e-2, rtol=5e-2), (out, ref)

    # Small demo config (input_size=64, in_ch=1, n_layers=3, init_channels=4):
    # every layer takes the single-tile (n_t == 1) path.
    run_case(64, 4, 3, 2)
    # Exercise the length-tiled path (adjacent-block halo, n_t > 1) by forcing
    # TL=128 on a slightly longer input.
    run_case(512, 4, 3, 2, force_tl=128)

    print("KERNEL_OK")
</pallas_src>

<mosaic_0001>
module attributes {stable_mosaic.version = 11 : i64} {
  func.func @kernel(%arg0: i32, %arg1: i32, %arg2: memref<1x2x1x39xbf16, #tpu.memory_space<vmem>>, %arg3: memref<2x4x8xbf16, #tpu.memory_space<vmem>>, %arg4: memref<4x1xf32, #tpu.memory_space<vmem>>, %arg5: memref<1x4x32xbf16, #tpu.memory_space<vmem>>, %arg6: memref<2x8x32xbf16, #tpu.memory_space<vmem>>) attributes {dimension_semantics = [#tpu.dimension_semantics<parallel>, #tpu.dimension_semantics<parallel>], iteration_bounds = array<i64: 2, 1>, scalar_prefetch = 0 : i64, scratch_operands = 1 : i64, tpu.core_type = #tpu.core_type<tc>, window_params = [{transform_indices = @transform_0, window_bounds = array<i64: 1, 2, 1, 39>}, {pipeline_mode = #tpu.pipeline_mode<synchronous>, transform_indices = @transform_1, window_bounds = array<i64: 2, 4, 8>}, {pipeline_mode = #tpu.pipeline_mode<synchronous>, transform_indices = @transform_2, window_bounds = array<i64: 4, 1>}, {transform_indices = @transform_3, window_bounds = array<i64: 1, 4, 32>}]} {
    %c0 = arith.constant 0 : index
    %c0_0 = arith.constant 0 : index
    %c0_1 = arith.constant 0 : index
    %c0_2 = arith.constant 0 : index
    %0 = vector.load %arg2[%c0, %c0_0, %c0_1, %c0_2] : memref<1x2x1x39xbf16, #tpu.memory_space<vmem>>, vector<1x1x1x32xbf16>
    %1 = vector.shape_cast %0 : vector<1x1x1x32xbf16> to vector<1x32xbf16>
    %c0_3 = arith.constant 0 : index
    %c0_4 = arith.constant 0 : index
    %c0_5 = arith.constant 0 : index
    %2 = vector.load %arg6[%c0_3, %c0_4, %c0_5] : memref<2x8x32xbf16, #tpu.memory_space<vmem>>, vector<1x1x32xbf16>
    %3 = vector.shape_cast %2 : vector<1x1x32xbf16> to vector<1x32xbf16>
    %4 = vector.shape_cast %1 : vector<1x32xbf16> to vector<1x1x32xbf16>
    tpu.vector_store %arg6[%c0_3, %c0_4, %c0_5], %4 {strides = array<i32>} : memref<2x8x32xbf16, #tpu.memory_space<vmem>>, vector<1x1x32xbf16>,
    %c0_6 = arith.constant 0 : index
    %c0_7 = arith.constant 0 : index
    %c0_8 = arith.constant 0 : index
    %c1 = arith.constant 1 : index
    %5 = vector.load %arg2[%c0_6, %c0_7, %c0_8, %c1] : memref<1x2x1x39xbf16, #tpu.memory_space<vmem>>, vector<1x1x1x32xbf16>
    %6 = vector.shape_cast %5 : vector<1x1x1x32xbf16> to vector<1x32xbf16>
    %c0_9 = arith.constant 0 : index
    %c1_10 = arith.constant 1 : index
    %c0_11 = arith.constant 0 : index
    %7 = vector.load %arg6[%c0_9, %c1_10, %c0_11] : memref<2x8x32xbf16, #tpu.memory_space<vmem>>, vector<1x1x32xbf16>
    %8 = vector.shape_cast %7 : vector<1x1x32xbf16> to vector<1x32xbf16>
    %9 = vector.shape_cast %6 : vector<1x32xbf16> to vector<1x1x32xbf16>
    tpu.vector_store %arg6[%c0_9, %c1_10, %c0_11], %9 {strides = array<i32>} : memref<2x8x32xbf16, #tpu.memory_space<vmem>>, vector<1x1x32xbf16>,
    %c0_12 = arith.constant 0 : index
    %c0_13 = arith.constant 0 : index
    %c0_14 = arith.constant 0 : index
    %c2 = arith.constant 2 : index
    %10 = vector.load %arg2[%c0_12, %c0_13, %c0_14, %c2] : memref<1x2x1x39xbf16, #tpu.memory_space<vmem>>, vector<1x1x1x32xbf16>
    %11 = vector.shape_cast %10 : vector<1x1x1x32xbf16> to vector<1x32xbf16>
    %c0_15 = arith.constant 0 : index
    %c2_16 = arith.constant 2 : index
    %c0_17 = arith.constant 0 : index
    %12 = vector.load %arg6[%c0_15, %c2_16, %c0_17] : memref<2x8x32xbf16, #tpu.memory_space<vmem>>, vector<1x1x32xbf16>
    %13 = vector.shape_cast %12 : vector<1x1x32xbf16> to vector<1x32xbf16>
    %14 = vector.shape_cast %11 : vector<1x32xbf16> to vector<1x1x32xbf16>
    tpu.vector_store %arg6[%c0_15, %c2_16, %c0_17], %14 {strides = array<i32>} : memref<2x8x32xbf16, #tpu.memory_space<vmem>>, vector<1x1x32xbf16>,
    %c0_18 = arith.constant 0 : index
    %c0_19 = arith.constant 0 : index
    %c0_20 = arith.constant 0 : index
    %c3 = arith.constant 3 : index
    %15 = vector.load %arg2[%c0_18, %c0_19, %c0_20, %c3] : memref<1x2x1x39xbf16, #tpu.memory_space<vmem>>, vector<1x1x1x32xbf16>
    %16 = vector.shape_cast %15 : vector<1x1x1x32xbf16> to vector<1x32xbf16>
    %c0_21 = arith.constant 0 : index
    %c3_22 = arith.constant 3 : index
    %c0_23 = arith.constant 0 : index
    %17 = vector.load %arg6[%c0_21, %c3_22, %c0_23] : memref<2x8x32xbf16, #tpu.memory_space<vmem>>, vector<1x1x32xbf16>
    %18 = vector.shape_cast %17 : vector<1x1x32xbf16> to vector<1x32xbf16>
    %19 = vector.shape_cast %16 : vector<1x32xbf16> to vector<1x1x32xbf16>
    tpu.vector_store %arg6[%c0_21, %c3_22, %c0_23], %19 {strides = array<i32>} : memref<2x8x32xbf16, #tpu.memory_space<vmem>>, vector<1x1x32xbf16>,
    %c0_24 = arith.constant 0 : index
    %c0_25 = arith.constant 0 : index
    %c0_26 = arith.constant 0 : index
    %c4 = arith.constant 4 : index
    %20 = vector.load %arg2[%c0_24, %c0_25, %c0_26, %c4] : memref<1x2x1x39xbf16, #tpu.memory_space<vmem>>, vector<1x1x1x32xbf16>
    %21 = vector.shape_cast %20 : vector<1x1x1x32xbf16> to vector<1x32xbf16>
    %c0_27 = arith.constant 0 : index
    %c4_28 = arith.constant 4 : index
    %c0_29 = arith.constant 0 : index
    %22 = vector.load %arg6[%c0_27, %c4_28, %c0_29] : memref<2x8x32xbf16, #tpu.memory_space<vmem>>, vector<1x1x32xbf16>
    %23 = vector.shape_cast %22 : vector<1x1x32xbf16> to vector<1x32xbf16>
    %24 = vector.shape_cast %21 : vector<1x32xbf16> to vector<1x1x32xbf16>
    tpu.vector_store %arg6[%c0_27, %c4_28, %c0_29], %24 {strides = array<i32>} : memref<2x8x32xbf16, #tpu.memory_space<vmem>>, vector<1x1x32xbf16>,
    %c0_30 = arith.constant 0 : index
    %c0_31 = arith.constant 0 : index
    %c0_32 = arith.constant 0 : index
    %c5 = arith.constant 5 : index
    %25 = vector.load %arg2[%c0_30, %c0_31, %c0_32, %c5] : memref<1x2x1x39xbf16, #tpu.memory_space<vmem>>, vector<1x1x1x32xbf16>
    %26 = vector.shape_cast %25 : vector<1x1x1x32xbf16> to vector<1x32xbf16>
    %c0_33 = arith.constant 0 : index
    %c5_34 = arith.constant 5 : index
    %c0_35 = arith.constant 0 : index
    %27 = vector.load %arg6[%c0_33, %c5_34, %c0_35] : memref<2x8x32xbf16, #tpu.memory_space<vmem>>, vector<1x1x32xbf16>
    %28 = vector.shape_cast %27 : vector<1x1x32xbf16> to vector<1x32xbf16>
    %29 = vector.shape_cast %26 : vector<1x32xbf16> to vector<1x1x32xbf16>
    tpu.vector_store %arg6[%c0_33, %c5_34, %c0_35], %29 {strides = array<i32>} : memref<2x8x32xbf16, #tpu.memory_space<vmem>>, vector<1x1x32xbf16>,
    %c0_36 = arith.constant 0 : index
    %c0_37 = arith.constant 0 : index
    %c0_38 = arith.constant 0 : index
    %c6 = arith.constant 6 : index
    %30 = vector.load %arg2[%c0_36, %c0_37, %c0_38, %c6] : memref<1x2x1x39xbf16, #tpu.memory_space<vmem>>, vector<1x1x1x32xbf16>
    %31 = vector.shape_cast %30 : vector<1x1x1x32xbf16> to vector<1x32xbf16>
    %c0_39 = arith.constant 0 : index
    %c6_40 = arith.constant 6 : index
    %c0_41 = arith.constant 0 : index
    %32 = vector.load %arg6[%c0_39, %c6_40, %c0_41] : memref<2x8x32xbf16, #tpu.memory_space<vmem>>, vector<1x1x32xbf16>
    %33 = vector.shape_cast %32 : vector<1x1x32xbf16> to vector<1x32xbf16>
    %34 = vector.shape_cast %31 : vector<1x32xbf16> to vector<1x1x32xbf16>
    tpu.vector_store %arg6[%c0_39, %c6_40, %c0_41], %34 {strides = array<i32>} : memref<2x8x32xbf16, #tpu.memory_space<vmem>>, vector<1x1x32xbf16>,
    %c0_42 = arith.constant 0 : index
    %c0_43 = arith.constant 0 : index
    %c0_44 = arith.constant 0 : index
    %c7 = arith.constant 7 : index
    %35 = vector.load %arg2[%c0_42, %c0_43, %c0_44, %c7] : memref<1x2x1x39xbf16, #tpu.memory_space<vmem>>, vector<1x1x1x32xbf16>
    %36 = vector.shape_cast %35 : vector<1x1x1x32xbf16> to vector<1x32xbf16>
    %c0_45 = arith.constant 0 : index
    %c7_46 = arith.constant 7 : index
    %c0_47 = arith.constant 0 : index
    %37 = vector.load %arg6[%c0_45, %c7_46, %c0_47] : memref<2x8x32xbf16, #tpu.memory_space<vmem>>, vector<1x1x32xbf16>
    %38 = vector.shape_cast %37 : vector<1x1x32xbf16> to vector<1x32xbf16>
    %39 = vector.shape_cast %36 : vector<1x32xbf16> to vector<1x1x32xbf16>
    tpu.vector_store %arg6[%c0_45, %c7_46, %c0_47], %39 {strides = array<i32>} : memref<2x8x32xbf16, #tpu.memory_space<vmem>>, vector<1x1x32xbf16>,
    %c0_48 = arith.constant 0 : index
    %c1_49 = arith.constant 1 : index
    %c0_50 = arith.constant 0 : index
    %c0_51 = arith.constant 0 : index
    %40 = vector.load %arg2[%c0_48, %c1_49, %c0_50, %c0_51] : memref<1x2x1x39xbf16, #tpu.memory_space<vmem>>, vector<1x1x1x32xbf16>
    %41 = vector.shape_cast %40 : vector<1x1x1x32xbf16> to vector<1x32xbf16>
    %c1_52 = arith.constant 1 : index
    %c0_53 = arith.constant 0 : index
    %c0_54 = arith.constant 0 : index
    %42 = vector.load %arg6[%c1_52, %c0_53, %c0_54] : memref<2x8x32xbf16, #tpu.memory_space<vmem>>, vector<1x1x32xbf16>
    %43 = vector.shape_cast %42 : vector<1x1x32xbf16> to vector<1x32xbf16>
    %44 = vector.shape_cast %41 : vector<1x32xbf16> to vector<1x1x32xbf16>
    tpu.vector_store %arg6[%c1_52, %c0_53, %c0_54], %44 {strides = array<i32>} : memref<2x8x32xbf16, #tpu.memory_space<vmem>>, vector<1x1x32xbf16>,
    %c0_55 = arith.constant 0 : index
    %c1_56 = arith.constant 1 : index
    %c0_57 = arith.constant 0 : index
    %c1_58 = arith.constant 1 : index
    %45 = vector.load %arg2[%c0_55, %c1_56, %c0_57, %c1_58] : memref<1x2x1x39xbf16, #tpu.memory_space<vmem>>, vector<1x1x1x32xbf16>
    %46 = vector.shape_cast %45 : vector<1x1x1x32xbf16> to vector<1x32xbf16>
    %c1_59 = arith.constant 1 : index
    %c1_60 = arith.constant 1 : index
    %c0_61 = arith.constant 0 : index
    %47 = vector.load %arg6[%c1_59, %c1_60, %c0_61] : memref<2x8x32xbf16, #tpu.memory_space<vmem>>, vector<1x1x32xbf16>
    %48 = vector.shape_cast %47 : vector<1x1x32xbf16> to vector<1x32xbf16>
    %49 = vector.shape_cast %46 : vector<1x32xbf16> to vector<1x1x32xbf16>
    tpu.vector_store %arg6[%c1_59, %c1_60, %c0_61], %49 {strides = array<i32>} : memref<2x8x32xbf16, #tpu.memory_space<vmem>>, vector<1x1x32xbf16>,
    %c0_62 = arith.constant 0 : index
    %c1_63 = arith.constant 1 : index
    %c0_64 = arith.constant 0 : index
    %c2_65 = arith.constant 2 : index
    %50 = vector.load %arg2[%c0_62, %c1_63, %c0_64, %c2_65] : memref<1x2x1x39xbf16, #tpu.memory_space<vmem>>, vector<1x1x1x32xbf16>
    %51 = vector.shape_cast %50 : vector<1x1x1x32xbf16> to vector<1x32xbf16>
    %c1_66 = arith.constant 1 : index
    %c2_67 = arith.constant 2 : index
    %c0_68 = arith.constant 0 : index
    %52 = vector.load %arg6[%c1_66, %c2_67, %c0_68] : memref<2x8x32xbf16, #tpu.memory_space<vmem>>, vector<1x1x32xbf16>
    %53 = vector.shape_cast %52 : vector<1x1x32xbf16> to vector<1x32xbf16>
    %54 = vector.shape_cast %51 : vector<1x32xbf16> to vector<1x1x32xbf16>
    tpu.vector_store %arg6[%c1_66, %c2_67, %c0_68], %54 {strides = array<i32>} : memref<2x8x32xbf16, #tpu.memory_space<vmem>>, vector<1x1x32xbf16>,
    %c0_69 = arith.constant 0 : index
    %c1_70 = arith.constant 1 : index
    %c0_71 = arith.constant 0 : index
    %c3_72 = arith.constant 3 : index
    %55 = vector.load %arg2[%c0_69, %c1_70, %c0_71, %c3_72] : memref<1x2x1x39xbf16, #tpu.memory_space<vmem>>, vector<1x1x1x32xbf16>
    %56 = vector.shape_cast %55 : vector<1x1x1x32xbf16> to vector<1x32xbf16>
    %c1_73 = arith.constant 1 : index
    %c3_74 = arith.constant 3 : index
    %c0_75 = arith.constant 0 : index
    %57 = vector.load %arg6[%c1_73, %c3_74, %c0_75] : memref<2x8x32xbf16, #tpu.memory_space<vmem>>, vector<1x1x32xbf16>
    %58 = vector.shape_cast %57 : vector<1x1x32xbf16> to vector<1x32xbf16>
    %59 = vector.shape_cast %56 : vector<1x32xbf16> to vector<1x1x32xbf16>
    tpu.vector_store %arg6[%c1_73, %c3_74, %c0_75], %59 {strides = array<i32>} : memref<2x8x32xbf16, #tpu.memory_space<vmem>>, vector<1x1x32xbf16>,
    %c0_76 = arith.constant 0 : index
    %c1_77 = arith.constant 1 : index
    %c0_78 = arith.constant 0 : index
    %c4_79 = arith.constant 4 : index
    %60 = vector.load %arg2[%c0_76, %c1_77, %c0_78, %c4_79] : memref<1x2x1x39xbf16, #tpu.memory_space<vmem>>, vector<1x1x1x32xbf16>
    %61 = vector.shape_cast %60 : vector<1x1x1x32xbf16> to vector<1x32xbf16>
    %c1_80 = arith.constant 1 : index
    %c4_81 = arith.constant 4 : index
    %c0_82 = arith.constant 0 : index
    %62 = vector.load %arg6[%c1_80, %c4_81, %c0_82] : memref<2x8x32xbf16, #tpu.memory_space<vmem>>, vector<1x1x32xbf16>
    %63 = vector.shape_cast %62 : vector<1x1x32xbf16> to vector<1x32xbf16>
    %64 = vector.shape_cast %61 : vector<1x32xbf16> to vector<1x1x32xbf16>
    tpu.vector_store %arg6[%c1_80, %c4_81, %c0_82], %64 {strides = array<i32>} : memref<2x8x32xbf16, #tpu.memory_space<vmem>>, vector<1x1x32xbf16>,
    %c0_83 = arith.constant 0 : index
    %c1_84 = arith.constant 1 : index
    %c0_85 = arith.constant 0 : index
    %c5_86 = arith.constant 5 : index
    %65 = vector.load %arg2[%c0_83, %c1_84, %c0_85, %c5_86] : memref<1x2x1x39xbf16, #tpu.memory_space<vmem>>, vector<1x1x1x32xbf16>
    %66 = vector.shape_cast %65 : vector<1x1x1x32xbf16> to vector<1x32xbf16>
    %c1_87 = arith.constant 1 : index
    %c5_88 = arith.constant 5 : index
    %c0_89 = arith.constant 0 : index
    %67 = vector.load %arg6[%c1_87, %c5_88, %c0_89] : memref<2x8x32xbf16, #tpu.memory_space<vmem>>, vector<1x1x32xbf16>
    %68 = vector.shape_cast %67 : vector<1x1x32xbf16> to vector<1x32xbf16>
    %69 = vector.shape_cast %66 : vector<1x32xbf16> to vector<1x1x32xbf16>
    tpu.vector_store %arg6[%c1_87, %c5_88, %c0_89], %69 {strides = array<i32>} : memref<2x8x32xbf16, #tpu.memory_space<vmem>>, vector<1x1x32xbf16>,
    %c0_90 = arith.constant 0 : index
    %c1_91 = arith.constant 1 : index
    %c0_92 = arith.constant 0 : index
    %c6_93 = arith.constant 6 : index
    %70 = vector.load %arg2[%c0_90, %c1_91, %c0_92, %c6_93] : memref<1x2x1x39xbf16, #tpu.memory_space<vmem>>, vector<1x1x1x32xbf16>
    %71 = vector.shape_cast %70 : vector<1x1x1x32xbf16> to vector<1x32xbf16>
    %c1_94 = arith.constant 1 : index
    %c6_95 = arith.constant 6 : index
    %c0_96 = arith.constant 0 : index
    %72 = vector.load %arg6[%c1_94, %c6_95, %c0_96] : memref<2x8x32xbf16, #tpu.memory_space<vmem>>, vector<1x1x32xbf16>
    %73 = vector.shape_cast %72 : vector<1x1x32xbf16> to vector<1x32xbf16>
    %74 = vector.shape_cast %71 : vector<1x32xbf16> to vector<1x1x32xbf16>
    tpu.vector_store %arg6[%c1_94, %c6_95, %c0_96], %74 {strides = array<i32>} : memref<2x8x32xbf16, #tpu.memory_space<vmem>>, vector<1x1x32xbf16>,
    %c0_97 = arith.constant 0 : index
    %c1_98 = arith.constant 1 : index
    %c0_99 = arith.constant 0 : index
    %c7_100 = arith.constant 7 : index
    %75 = vector.load %arg2[%c0_97, %c1_98, %c0_99, %c7_100] : memref<1x2x1x39xbf16, #tpu.memory_space<vmem>>, vector<1x1x1x32xbf16>
    %76 = vector.shape_cast %75 : vector<1x1x1x32xbf16> to vector<1x32xbf16>
    %c1_101 = arith.constant 1 : index
    %c7_102 = arith.constant 7 : index
    %c0_103 = arith.constant 0 : index
    %77 = vector.load %arg6[%c1_101, %c7_102, %c0_103] : memref<2x8x32xbf16, #tpu.memory_space<vmem>>, vector<1x1x32xbf16>
    %78 = vector.shape_cast %77 : vector<1x1x32xbf16> to vector<1x32xbf16>
    %79 = vector.shape_cast %76 : vector<1x32xbf16> to vector<1x1x32xbf16>
    tpu.vector_store %arg6[%c1_101, %c7_102, %c0_103], %79 {strides = array<i32>} : memref<2x8x32xbf16, #tpu.memory_space<vmem>>, vector<1x1x32xbf16>,
    %c0_104 = arith.constant 0 : index
    %c0_105 = arith.constant 0 : index
    %c0_106 = arith.constant 0 : index
    %80 = vector.load %arg3[%c0_104, %c0_105, %c0_106] : memref<2x4x8xbf16, #tpu.memory_space<vmem>>, vector<1x4x8xbf16>
    %81 = vector.shape_cast %80 : vector<1x4x8xbf16> to vector<4x8xbf16>
    %c0_107 = arith.constant 0 : index
    %c0_108 = arith.constant 0 : index
    %c0_109 = arith.constant 0 : index
    %82 = vector.load %arg6[%c0_107, %c0_108, %c0_109] : memref<2x8x32xbf16, #tpu.memory_space<vmem>>, vector<1x8x32xbf16>
    %83 = vector.shape_cast %82 : vector<1x8x32xbf16> to vector<8x32xbf16>
    %cst = arith.constant dense<0.000000e+00> : vector<4x32xf32>
    %84 = tpu.matmul %81, %83, %cst {dimension_numbers = #tpu.dot_dimension_numbers<[1], [0], [0], [1], [0, 0, 1, 1], [], []>} : vector<4x8xbf16>, vector<8x32xbf16>, vector<4x32xf32> -> vector<4x32xf32>
    %c1_110 = arith.constant 1 : index
    %c0_111 = arith.constant 0 : index
    %c0_112 = arith.constant 0 : index
    %85 = vector.load %arg3[%c1_110, %c0_111, %c0_112] : memref<2x4x8xbf16, #tpu.memory_space<vmem>>, vector<1x4x8xbf16>
    %86 = vector.shape_cast %85 : vector<1x4x8xbf16> to vector<4x8xbf16>
    %c1_113 = arith.constant 1 : index
    %c0_114 = arith.constant 0 : index
    %c0_115 = arith.constant 0 : index
    %87 = vector.load %arg6[%c1_113, %c0_114, %c0_115] : memref<2x8x32xbf16, #tpu.memory_space<vmem>>, vector<1x8x32xbf16>
    %88 = vector.shape_cast %87 : vector<1x8x32xbf16> to vector<8x32xbf16>
    %cst_116 = arith.constant dense<0.000000e+00> : vector<4x32xf32>
    %89 = tpu.matmul %86, %88, %cst_116 {dimension_numbers = #tpu.dot_dimension_numbers<[1], [0], [0], [1], [0, 0, 1, 1], [], []>} : vector<4x8xbf16>, vector<8x32xbf16>, vector<4x32xf32> -> vector<4x32xf32>
    %90 = arith.addf %84, %89 : vector<4x32xf32>
    %c0_117 = arith.constant 0 : index
    %c0_118 = arith.constant 0 : index
    %91 = vector.load %arg4[%c0_117, %c0_118] : memref<4x1xf32, #tpu.memory_space<vmem>>, vector<4x1xf32>
    %92 = vector.broadcast %91 : vector<4x1xf32> to vector<4x32xf32>
    %93 = arith.addf %90, %92 : vector<4x32xf32>
    %cst_119 = arith.constant 0.000000e+00 : f32
    %94 = vector.broadcast %cst_119 : f32 to vector<4x32xf32>
    %95 = arith.cmpf ogt, %93, %94 : vector<4x32xf32>
    %cst_120 = arith.constant 2.000000e-01 : f32
    %96 = vector.broadcast %cst_120 : f32 to vector<4x32xf32>
    %97 = arith.mulf %96, %93 : vector<4x32xf32>
    %98 = arith.select %95, %93, %97 : vector<4x32xi1>, vector<4x32xf32>
    %99 = arith.truncf %98 : vector<4x32xf32> to vector<4x32xbf16>
    %c0_121 = arith.constant 0 : index
    %c0_122 = arith.constant 0 : index
    %c0_123 = arith.constant 0 : index
    %100 = vector.load %arg5[%c0_121, %c0_122, %c0_123] : memref<1x4x32xbf16, #tpu.memory_space<vmem>>, vector<1x4x32xbf16>
    %101 = vector.shape_cast %100 : vector<1x4x32xbf16> to vector<4x32xbf16>
    %102 = vector.shape_cast %99 : vector<4x32xbf16> to vector<1x4x32xbf16>
    tpu.vector_store %arg5[%c0_121, %c0_122, %c0_123], %102 {strides = array<i32>} : memref<1x4x32xbf16, #tpu.memory_space<vmem>>, vector<1x4x32xbf16>,
    return
  }
  func.func @transform_0(%arg0: i32, %arg1: i32) -> (i32, i32, i32, i32) {
    %c0_i32 = arith.constant 0 : i32
    %c0_i32_0 = arith.constant 0 : i32
    %c0_i32_1 = arith.constant 0 : i32
    %c0_i32_2 = arith.constant 0 : i32
    return %arg0, %c0_i32, %c0_i32_0, %c0_i32_1 : i32, i32, i32, i32
  }
  func.func @transform_1(%arg0: i32, %arg1: i32) -> (i32, i32, i32) {
    %c0_i32 = arith.constant 0 : i32
    %c0_i32_0 = arith.constant 0 : i32
    %c0_i32_1 = arith.constant 0 : i32
    %c0_i32_2 = arith.constant 0 : i32
    return %c0_i32, %c0_i32_0, %c0_i32_1 : i32, i32, i32
  }
  func.func @transform_2(%arg0: i32, %arg1: i32) -> (i32, i32) {
    %c0_i32 = arith.constant 0 : i32
    %c0_i32_0 = arith.constant 0 : i32
    %c0_i32_1 = arith.constant 0 : i32
    return %c0_i32, %c0_i32_0 : i32, i32
  }
  func.func @transform_3(%arg0: i32, %arg1: i32) -> (i32, i32, i32) {
    %c0_i32 = arith.constant 0 : i32
    %c0_i32_0 = arith.constant 0 : i32
    return %arg0, %c0_i32, %arg1 : i32, i32, i32
  }
}

</mosaic_0001>

<llo_original>
// kernel: tpu_custom_call.1
$region0: #{tpu_custom_call.1}
  #allocation0 [shape = 'u32[]', space=smem, size = 0x4, offset = 0x4, fixed_abs, tag = 'smem constant byte address 0x4 - core index']
  #allocation1 [shape = 'u32[144,128]{1,0:T(1,128)}', space=vmem, size = 0x12000, scoped, tag = 'internal scratch']
  #allocation2 [shape = 'bf16[2,8,32]{2,1,0:T(8,128)(2,1)}', space=vmem, size = 0x1000, scoped, tag = 'scratch operand']
  %s0 = inlined_call_operand.vmem [shape: bf16[2,2,1,39], index: 0, kind: input, shape index: {}]
  %s1 = inlined_call_operand.vmem [shape: bf16[2,4,8], index: 1, kind: input, shape index: {}]
  %s2 = inlined_call_operand.vmem [shape: f32[4,1], index: 2, kind: input, shape index: {}]
  %s3 = inlined_call_operand.hbm [shape: bf16[2,4,32], index: 3, kind: output, shape index: {}]
  %s4 = sld [smem:[#allocation0]]
  $region45: #{tpu_custom_call.1} parent=0
    _
  %s6 = ssub.s32 1, %s4
  %s7 = scalar_select 0, %s6, %s4
  $region1: #{tpu_custom_call.1} parent=0
    #allocation3 [shape = 'u8[2048]{0}', space=vmem, size = 0x800, scoped, tag = 'output window, operand 0']
    #allocation4 [shape = 's32[2]{0}', space=sflag, size = 0x8, scoped, tag = 'scoped memory for tpu_custom_call.1']
    %8 = vsyncpa [#allocation4], 0
    %s9 = scalar_lea.sflag [#allocation4], 1
    %10 = vsyncpa %s9, 0
    loop: start=0, step=1, limit=4
    $region2: #{tpu_custom_call.1} parent=1 // loop_pre_header
      _
    $region3: #{tpu_custom_call.1} parent=1 // loop_header
      %s12 = sphi 0, %s16
      %p13 = scmp.ge.s32.totalorder %s12, 4
      %s19 = sphi 0, %s31
      %s20 = sphi 0, %s27
      %s21 = sphi 0, %s19
      %s22 = sphi 0, %s20
      %s23 = sphi 0, %s21
      %s24 = sphi 0, %s22
      %s34 = sphi 0, %s36
      %s37 = sphi 0, %s34
      %s38 = sphi 0, %s37
      %s54 = sphi 0, %s38
      %s58 = sphi 0, %s58
      %s60 = sphi 0, %s58
      %s61 = sphi 0, %s60
      %s75 = sphi 0, %s61
      %s79 = sphi 0, %s79
      %s81 = sphi 0, %s79
      %s82 = sphi 0, %s81
      %s96 = sphi 0, %s82
      %s104 = sphi 0, %s106
      %s107 = sphi 0, %s104
      %s108 = sphi 0, %s107
      %s124 = sphi 0, %s108
    $region4: #{tpu_custom_call.1} parent=1 // loop_header_branch
      %15 = sbr.rel (%p13) target = $region8
    $region5: #{tpu_custom_call.1} parent=1 // loop_body
      %s17 = ssub.s32 %s12, 1
      %s18 = ssub.s32 %s12, 2
      %s25 = sadd.s32 1, %s20
      %p26 = scmp.ge.s32.totalorder %s25, 1
      %s27 = scalar_select %p26, 0, %s25
      %s28 = sadd.s32 1, %s19
      %s29 = scalar_select %p26, %s28, %s19
      %p30 = scmp.ge.s32.totalorder %s29, 2
      %s31 = scalar_select %p30, 0, %s29
      %s32 = ssub.s32 %s19, %s31
      %p33 = scmp.eq.s32.totalorder %s32, 0
      %s35 = sadd.s32 %s34, 1
      %s36 = scalar_select %p33, %s34, %s35
      %p39 = pneg %p33
      %p40 = scmp.eq.s32.totalorder %s12, 1
      %p41 = por %p39, %p40
      %p42 = scmp.ne.s32.totalorder %s34, %s37
      %p43 = scmp.eq.s32.totalorder %s12, 0
      %p44 = por %p42, %p43
      %p45 = scmp.ne.s32.totalorder %s34, %s37
      %p46 = scmp.eq.s32.totalorder %s17, 1
      %p47 = por %p45, %p46
      %p48 = scmp.ne.s32.totalorder %s37, %s38
      %p49 = scmp.eq.s32.totalorder %s17, 0
      %p50 = por %p48, %p49
      %p51 = scmp.ne.s32.totalorder %s37, %s38
      %p52 = scmp.eq.s32.totalorder %s18, 1
      %p53 = por %p51, %p52
      %p55 = scmp.ne.s32.totalorder %s38, %s54
      %p56 = scmp.eq.s32.totalorder %s18, 0
      %p57 = por %p55, %p56
      %s59 = sadd.s32 %s58, 1
      %p62 = scmp.eq.s32.totalorder %s12, 1
      %p63 = scmp.ne.s32.totalorder %s58, %s60
      %p64 = scmp.eq.s32.totalorder %s12, 0
      %p65 = por %p63, %p64
      %p66 = scmp.ne.s32.totalorder %s58, %s60
      %p67 = scmp.eq.s32.totalorder %s17, 1
      %p68 = por %p66, %p67
      %p69 = scmp.ne.s32.totalorder %s60, %s61
      %p70 = scmp.eq.s32.totalorder %s17, 0
      %p71 = por %p69, %p70
      %p72 = scmp.ne.s32.totalorder %s60, %s61
      %p73 = scmp.eq.s32.totalorder %s18, 1
      %p74 = por %p72, %p73
      %p76 = scmp.ne.s32.totalorder %s61, %s75
      %p77 = scmp.eq.s32.totalorder %s18, 0
      %p78 = por %p76, %p77
      %s80 = sadd.s32 %s79, 1
      %p83 = scmp.eq.s32.totalorder %s12, 1
      %p84 = scmp.ne.s32.totalorder %s79, %s81
      %p85 = scmp.eq.s32.totalorder %s12, 0
      %p86 = por %p84, %p85
      %p87 = scmp.ne.s32.totalorder %s79, %s81
      %p88 = scmp.eq.s32.totalorder %s17, 1
      %p89 = por %p87, %p88
      %p90 = scmp.ne.s32.totalorder %s81, %s82
      %p91 = scmp.eq.s32.totalorder %s17, 0
      %p92 = por %p90, %p91
      %p93 = scmp.ne.s32.totalorder %s81, %s82
      %p94 = scmp.eq.s32.totalorder %s18, 1
      %p95 = por %p93, %p94
      %p97 = scmp.ne.s32.totalorder %s82, %s96
      %p98 = scmp.eq.s32.totalorder %s18, 0
      %p99 = por %p97, %p98
      %s100 = ssub.s32 %s19, %s31
      %s101 = ssub.s32 %s20, %s27
      %s102 = sor.u32 %s100, %s101
      %p103 = scmp.eq.s32.totalorder %s102, 0
      %s105 = sadd.s32 %s104, 1
      %s106 = scalar_select %p103, %s104, %s105
      %p109 = pneg %p103
      %p110 = scmp.eq.s32.totalorder %s12, 1
      %p111 = por %p109, %p110
      %p112 = scmp.ne.s32.totalorder %s104, %s107
      %p113 = scmp.eq.s32.totalorder %s12, 0
      %p114 = por %p112, %p113
      %p115 = scmp.ne.s32.totalorder %s104, %s107
      %p116 = scmp.eq.s32.totalorder %s17, 1
      %p117 = por %p115, %p116
      %p118 = scmp.ne.s32.totalorder %s107, %s108
      %p119 = scmp.eq.s32.totalorder %s17, 0
      %p120 = por %p118, %p119
      %p121 = scmp.ne.s32.totalorder %s107, %s108
      %p122 = scmp.eq.s32.totalorder %s18, 1
      %p123 = por %p121, %p122
      %p125 = scmp.ne.s32.totalorder %s108, %s124
      %p126 = scmp.eq.s32.totalorder %s18, 0
      %p127 = por %p125, %p126
      %p128 = scmp.le.s32.totalorder 1, %s12
      %p129 = scmp.lt.s32.totalorder %s12, 3
      %p130 = pnand %p128, %p129
      %p131 = pneg %p130
      // Predicated region
      $region9: #{tpu_custom_call.1} parent=5 // pred_check
        _
      $region10: #{tpu_custom_call.1} parent=5 // pred_check_branch
        %133 = sbr.rel (%p130) target = $region12
      $region11: #{tpu_custom_call.1} parent=5 // pred_region
        %s134 = ssub.s32 %s12, 1
        // Predicated region
        $region13: #{tpu_custom_call.1} parent=11 // pred_check
          %p135 = pneg %p71
        $region14: #{tpu_custom_call.1} parent=11 // pred_check_branch
          %137 = sbr.rel (%p135) target = $region16
        $region15: #{tpu_custom_call.1} parent=11 // pred_region
          _
        $region16: #{tpu_custom_call.1} parent=11 // pred_fallthru
          _
        // Predicated region
        $region17: #{tpu_custom_call.1} parent=11 // pred_check
          %p138 = pneg %p92
        $region18: #{tpu_custom_call.1} parent=11 // pred_check_branch
          %140 = sbr.rel (%p138) target = $region20
        $region19: #{tpu_custom_call.1} parent=11 // pred_region
          _
        $region20: #{tpu_custom_call.1} parent=11 // pred_fallthru
          _
      $region12: #{tpu_custom_call.1} parent=5 // pred_fallthru
        _
      %p141 = scmp.lt.s32.totalorder %s12, 2
      // Predicated region
      $region21: #{tpu_custom_call.1} parent=5 // pred_check
        %p142 = pneg %p141
      $region22: #{tpu_custom_call.1} parent=5 // pred_check_branch
        %144 = sbr.rel (%p142) target = $region24
      $region23: #{tpu_custom_call.1} parent=5 // pred_region
        // Predicated region
        $region25: #{tpu_custom_call.1} parent=23 // pred_check
          %p145 = pneg %p44
        $region26: #{tpu_custom_call.1} parent=23 // pred_check_branch
          %147 = sbr.rel (%p145) target = $region28
        $region27: #{tpu_custom_call.1} parent=23 // pred_region
          %p148 = scmp.lt.s32.totalorder %s19, 1
          %s149 = scalar_select %p148, %s19, 1
          %s150 = smul.addr %s149, 2
          %s151 = scalar_lea.vmem %s0, %s150
        $region28: #{tpu_custom_call.1} parent=23 // pred_fallthru
          _
      $region24: #{tpu_custom_call.1} parent=5 // pred_fallthru
        _
      %p152 = scmp.le.s32.totalorder 1, %s12
      %p153 = scmp.lt.s32.totalorder %s12, 3
      %p154 = pnand %p152, %p153
      %p155 = pneg %p154
      // Predicated region
      $region29: #{tpu_custom_call.1} parent=5 // pred_check
        _
      $region30: #{tpu_custom_call.1} parent=5 // pred_check_branch
        %157 = sbr.rel (%p154) target = $region32
      $region31: #{tpu_custom_call.1} parent=5 // pred_region
        %s158 = ssub.s32 %s12, 1
        %p159 = scmp.lt.s32.totalorder %s21, 1
        %s160 = scalar_select %p159, %s21, 1
        %s161 = smul.addr %s160, 2
        %s162 = scalar_lea.vmem %s0, %s161
        %p163 = pneg %p50
        %p164 = pneg %p47
        %p165 = pneg %p71
        %p166 = pneg %p68
        %p167 = pneg %p92
        %p168 = pneg %p89
        %p169 = pneg %p120
        %p170 = pneg %p117
        %s171 = sand.u32 %s107, 1
        %s172 = scalar_lea.sflag [#allocation4], %s171
        %s173 = sand.u32 %s107, 1
        %s174 = smul.addr %s173, 2
        %s175 = scalar_lea.vmem [#allocation3], %s174
        %p176 = scmp.lt.s32.totalorder %s21, 1
        %s177 = scalar_select %p176, %s21, 1
        %s178 = smul.addr %s177, 2
        %s179 = scalar_lea.vmem %s0, %s178
        %v181 = vld [vmem:[%s179] sm:$0x1]
        %vm182 = vcmask 253952
        %vm183 = vsmask.f32 256
        %vm184 = vmand %vm182, %vm183
        %v185 = vld [vmem:[#allocation2] sm:$0x1]
        %v186 = vsel %vm184, %v181, %v185
        %187 = vst [vmem:[#allocation2] sm:$0x1] %v186
        %v188 = vld [vmem:[%s179] sm:$0x1]
        %v191 = vunpack.c.l.s4 1935823168
        %v192 = vunpack.c.0.s8 %v191
        %v193 = vlaneseq
        %v194 = vshrl.u32 %v193, 7
        %v195 = vsub.s32 %v192, %v194
        %v196 = vrot.slane %v188, %v195
        %v198 = vunpack.c.l.s4 1935823168
        %v199 = vunpack.c.0.s8 %v198
        %v200 = vlaneseq
        %v201 = vshrl.u32 %v200, 7
        %v202 = vsub.s32 %v199, %v201
        %v203 = vrot.slane %v196, %v202
        %v205 = vshll.u32 %v203, 16
        %207 = vrot.lane.b32.xlu0 %v205, 127
        %v208 = vpop.permute.xlu0 %207
        %vm210 = vsmask.f32 7938
        %vm211 = vmand %vm182, %vm210
        %v212 = vld [vmem:[#allocation2] sm:$0x1]
        %v213 = vsel %vm211, %v208, %v212
        %214 = vst [vmem:[#allocation2] sm:$0x1] %v213
        %v215 = vld [vmem:[%s179] sm:$0x1]
        %v218 = vunpack.c.l.s4 1935823168
        %v219 = vunpack.c.0.s8 %v218
        %v220 = vlaneseq
        %v221 = vshrl.u32 %v220, 7
        %v222 = vsub.s32 %v219, %v221
        %v223 = vrot.slane %v215, %v222
        %v224 = vcombine.low %v223, %v223
        %v226 = vunpack.c.l.s4 1935823168
        %v227 = vunpack.c.0.s8 %v226
        %v228 = vlaneseq
        %v229 = vshrl.u32 %v228, 7
        %v230 = vsub.s32 %v227, %v229
        %v231 = vrot.slane %v224, %v230
        %232 = vrot.lane.b32.xlu0 %v231, 126
        %v233 = vpop.permute.xlu0 %232
        %vm235 = vcmask 254977
        %vm236 = vsmask.f32 1280
        %vm237 = vmand %vm235, %vm236
        %v238 = vld [vmem:[#allocation2] sm:$0x2]
        %v239 = vsel %vm237, %v233, %v238
        %240 = vst [vmem:[#allocation2] sm:$0x2] %v239
        %v241 = vld [vmem:[%s179] sm:$0x1]
        %v244 = vunpack.c.l.s4 1935823168
        %v245 = vunpack.c.0.s8 %v244
        %v246 = vlaneseq
        %v247 = vshrl.u32 %v246, 7
        %v248 = vsub.s32 %v245, %v247
        %v249 = vrot.slane %v241, %v248
        %v251 = vunpack.c.l.s4 1935823168
        %v252 = vunpack.c.0.s8 %v251
        %v253 = vlaneseq
        %v254 = vshrl.u32 %v253, 7
        %v255 = vsub.s32 %v252, %v254
        %v256 = vrot.slane %v249, %v255
        %v258 = vshll.u32 %v256, 16
        %v260 = vrot.slane %v258, 7
        %261 = vrot.lane.b32.xlu0 %v260, 125
        %v262 = vpop.permute.xlu0 %261
        %vm264 = vsmask.f32 7942
        %vm265 = vmand %vm235, %vm264
        %v266 = vld [vmem:[#allocation2] sm:$0x2]
        %v267 = vsel %vm265, %v262, %v266
        %268 = vst [vmem:[#allocation2] sm:$0x2] %v267
        %v269 = vld [vmem:[%s179] sm:$0x1]
        %v271 = vcombine.low %v269, %v269
        %v273 = vunpack.c.l.s4 1935823168
        %v274 = vunpack.c.0.s8 %v273
        %v275 = vlaneseq
        %v276 = vshrl.u32 %v275, 7
        %v277 = vsub.s32 %v274, %v276
        %v278 = vrot.slane %v271, %v277
        %v280 = vunpack.c.l.s4 1935823168
        %v281 = vunpack.c.0.s8 %v280
        %v282 = vlaneseq
        %v283 = vshrl.u32 %v282, 7
        %v284 = vsub.s32 %v281, %v283
        %v285 = vrot.slane %v278, %v284
        %286 = vrot.lane.b32.xlu0 %v285, 124
        %v287 = vpop.permute.xlu0 %286
        %vm289 = vcmask 256002
        %vm290 = vsmask.f32 2304
        %vm291 = vmand %vm289, %vm290
        %v292 = vld [vmem:[#allocation2] sm:$0x4]
        %v293 = vsel %vm291, %v287, %v292
        %294 = vst [vmem:[#allocation2] sm:$0x4] %v293
        %v295 = vld [vmem:[%s179] sm:$0x1]
        %v298 = vunpack.c.l.s4 1935823168
        %v299 = vunpack.c.0.s8 %v298
        %v300 = vlaneseq
        %v301 = vshrl.u32 %v300, 7
        %v302 = vsub.s32 %v299, %v301
        %v303 = vrot.slane %v295, %v302
        %v305 = vunpack.c.l.s4 1935823168
        %v306 = vunpack.c.0.s8 %v305
        %v307 = vlaneseq
        %v308 = vshrl.u32 %v307, 7
        %v309 = vsub.s32 %v306, %v308
        %v310 = vrot.slane %v303, %v309
        %v312 = vshll.u32 %v310, 16
        %v314 = vrot.slane %v312, 6
        %315 = vrot.lane.b32.xlu0 %v314, 123
        %v316 = vpop.permute.xlu0 %315
        %vm318 = vsmask.f32 7946
        %vm319 = vmand %vm289, %vm318
        %v320 = vld [vmem:[#allocation2] sm:$0x4]
        %v321 = vsel %vm319, %v316, %v320
        %322 = vst [vmem:[#allocation2] sm:$0x4] %v321
        %v323 = vld [vmem:[%s179] sm:$0x1]
        %v325 = vcombine.low %v323, %v323
        %v327 = vunpack.c.l.s4 1935823168
        %v328 = vunpack.c.0.s8 %v327
        %v329 = vlaneseq
        %v330 = vshrl.u32 %v329, 7
        %v331 = vsub.s32 %v328, %v330
        %v332 = vrot.slane %v325, %v331
        %v333 = vcombine.low %v332, %v332
        %v335 = vunpack.c.l.s4 1935823168
        %v336 = vunpack.c.0.s8 %v335
        %v337 = vlaneseq
        %v338 = vshrl.u32 %v337, 7
        %v339 = vsub.s32 %v336, %v338
        %v340 = vrot.slane %v333, %v339
        %341 = vrot.lane.b32.xlu0 %v340, 122
        %v342 = vpop.permute.xlu0 %341
        %vm344 = vcmask 257027
        %vm345 = vsmask.f32 3328
        %vm346 = vmand %vm344, %vm345
        %v347 = vld [vmem:[#allocation2] sm:$0x8]
        %v348 = vsel %vm346, %v342, %v347
        %349 = vst [vmem:[#allocation2] sm:$0x8] %v348
        %v350 = vld [vmem:[%s179] sm:$0x1]
        %v353 = vunpack.c.l.s4 1935823168
        %v354 = vunpack.c.0.s8 %v353
        %v355 = vlaneseq
        %v356 = vshrl.u32 %v355, 7
        %v357 = vsub.s32 %v354, %v356
        %v358 = vrot.slane %v350, %v357
        %v360 = vunpack.c.l.s4 1935823168
        %v361 = vunpack.c.0.s8 %v360
        %v362 = vlaneseq
        %v363 = vshrl.u32 %v362, 7
        %v364 = vsub.s32 %v361, %v363
        %v365 = vrot.slane %v358, %v364
        %v367 = vshll.u32 %v365, 16
        %v369 = vrot.slane %v367, 5
        %370 = vrot.lane.b32.xlu0 %v369, 121
        %v371 = vpop.permute.xlu0 %370
        %vm373 = vsmask.f32 7950
        %vm374 = vmand %vm344, %vm373
        %v375 = vld [vmem:[#allocation2] sm:$0x8]
        %v376 = vsel %vm374, %v371, %v375
        %377 = vst [vmem:[#allocation2] sm:$0x8] %v376
        %s378 = scalar_lea.vmem %s179, 1
        %v379 = vld [vmem:[%s378] sm:$0x1]
        %s380 = scalar_lea.vmem [#allocation2], 4
        %v381 = vld [vmem:[%s380] sm:$0x1]
        %v382 = vsel %vm184, %v379, %v381
        %383 = vst [vmem:[%s380] sm:$0x1] %v382
        %v384 = vld [vmem:[%s378] sm:$0x1]
        %v387 = vunpack.c.l.s4 1935823168
        %v388 = vunpack.c.0.s8 %v387
        %v389 = vlaneseq
        %v390 = vshrl.u32 %v389, 7
        %v391 = vsub.s32 %v388, %v390
        %v392 = vrot.slane %v384, %v391
        %v394 = vunpack.c.l.s4 1935823168
        %v395 = vunpack.c.0.s8 %v394
        %v396 = vlaneseq
        %v397 = vshrl.u32 %v396, 7
        %v398 = vsub.s32 %v395, %v397
        %v399 = vrot.slane %v392, %v398
        %v401 = vshll.u32 %v399, 16
        %403 = vrot.lane.b32.xlu0 %v401, 127
        %v404 = vpop.permute.xlu0 %403
        %v406 = vld [vmem:[%s380] sm:$0x1]
        %v407 = vsel %vm211, %v404, %v406
        %408 = vst [vmem:[%s380] sm:$0x1] %v407
        %v409 = vld [vmem:[%s378] sm:$0x1]
        %v412 = vunpack.c.l.s4 1935823168
        %v413 = vunpack.c.0.s8 %v412
        %v414 = vlaneseq
        %v415 = vshrl.u32 %v414, 7
        %v416 = vsub.s32 %v413, %v415
        %v417 = vrot.slane %v409, %v416
        %v418 = vcombine.low %v417, %v417
        %v420 = vunpack.c.l.s4 1935823168
        %v421 = vunpack.c.0.s8 %v420
        %v422 = vlaneseq
        %v423 = vshrl.u32 %v422, 7
        %v424 = vsub.s32 %v421, %v423
        %v425 = vrot.slane %v418, %v424
        %426 = vrot.lane.b32.xlu0 %v425, 126
        %v427 = vpop.permute.xlu0 %426
        %v429 = vld [vmem:[%s380] sm:$0x2]
        %v430 = vsel %vm237, %v427, %v429
        %431 = vst [vmem:[%s380] sm:$0x2] %v430
        %v432 = vld [vmem:[%s378] sm:$0x1]
        %v435 = vunpack.c.l.s4 1935823168
        %v436 = vunpack.c.0.s8 %v435
        %v437 = vlaneseq
        %v438 = vshrl.u32 %v437, 7
        %v439 = vsub.s32 %v436, %v438
        %v440 = vrot.slane %v432, %v439
        %v442 = vunpack.c.l.s4 1935823168
        %v443 = vunpack.c.0.s8 %v442
        %v444 = vlaneseq
        %v445 = vshrl.u32 %v444, 7
        %v446 = vsub.s32 %v443, %v445
        %v447 = vrot.slane %v440, %v446
        %v449 = vshll.u32 %v447, 16
        %v451 = vrot.slane %v449, 7
        %452 = vrot.lane.b32.xlu0 %v451, 125
        %v453 = vpop.permute.xlu0 %452
        %v455 = vld [vmem:[%s380] sm:$0x2]
        %v456 = vsel %vm265, %v453, %v455
        %457 = vst [vmem:[%s380] sm:$0x2] %v456
        %v458 = vld [vmem:[%s378] sm:$0x1]
        %v460 = vcombine.low %v458, %v458
        %v462 = vunpack.c.l.s4 1935823168
        %v463 = vunpack.c.0.s8 %v462
        %v464 = vlaneseq
        %v465 = vshrl.u32 %v464, 7
        %v466 = vsub.s32 %v463, %v465
        %v467 = vrot.slane %v460, %v466
        %v469 = vunpack.c.l.s4 1935823168
        %v470 = vunpack.c.0.s8 %v469
        %v471 = vlaneseq
        %v472 = vshrl.u32 %v471, 7
        %v473 = vsub.s32 %v470, %v472
        %v474 = vrot.slane %v467, %v473
        %475 = vrot.lane.b32.xlu0 %v474, 124
        %v476 = vpop.permute.xlu0 %475
        %v478 = vld [vmem:[%s380] sm:$0x4]
        %v479 = vsel %vm291, %v476, %v478
        %480 = vst [vmem:[%s380] sm:$0x4] %v479
        %v481 = vld [vmem:[%s378] sm:$0x1]
        %v484 = vunpack.c.l.s4 1935823168
        %v485 = vunpack.c.0.s8 %v484
        %v486 = vlaneseq
        %v487 = vshrl.u32 %v486, 7
        %v488 = vsub.s32 %v485, %v487
        %v489 = vrot.slane %v481, %v488
        %v491 = vunpack.c.l.s4 1935823168
        %v492 = vunpack.c.0.s8 %v491
        %v493 = vlaneseq
        %v494 = vshrl.u32 %v493, 7
        %v495 = vsub.s32 %v492, %v494
        %v496 = vrot.slane %v489, %v495
        %v498 = vshll.u32 %v496, 16
        %v500 = vrot.slane %v498, 6
        %501 = vrot.lane.b32.xlu0 %v500, 123
        %v502 = vpop.permute.xlu0 %501
        %v504 = vld [vmem:[%s380] sm:$0x4]
        %v505 = vsel %vm319, %v502, %v504
        %506 = vst [vmem:[%s380] sm:$0x4] %v505
        %v507 = vld [vmem:[%s378] sm:$0x1]
        %v509 = vcombine.low %v507, %v507
        %v511 = vunpack.c.l.s4 1935823168
        %v512 = vunpack.c.0.s8 %v511
        %v513 = vlaneseq
        %v514 = vshrl.u32 %v513, 7
        %v515 = vsub.s32 %v512, %v514
        %v516 = vrot.slane %v509, %v515
        %v517 = vcombine.low %v516, %v516
        %v519 = vunpack.c.l.s4 1935823168
        %v520 = vunpack.c.0.s8 %v519
        %v521 = vlaneseq
        %v522 = vshrl.u32 %v521, 7
        %v523 = vsub.s32 %v520, %v522
        %v524 = vrot.slane %v517, %v523
        %525 = vrot.lane.b32.xlu0 %v524, 122
        %v526 = vpop.permute.xlu0 %525
        %v528 = vld [vmem:[%s380] sm:$0x8]
        %v529 = vsel %vm346, %v526, %v528
        %530 = vst [vmem:[%s380] sm:$0x8] %v529
        %v531 = vld [vmem:[%s378] sm:$0x1]
        %v534 = vunpack.c.l.s4 1935823168
        %v535 = vunpack.c.0.s8 %v534
        %v536 = vlaneseq
        %v537 = vshrl.u32 %v536, 7
        %v538 = vsub.s32 %v535, %v537
        %v539 = vrot.slane %v531, %v538
        %v541 = vunpack.c.l.s4 1935823168
        %v542 = vunpack.c.0.s8 %v541
        %v543 = vlaneseq
        %v544 = vshrl.u32 %v543, 7
        %v545 = vsub.s32 %v542, %v544
        %v546 = vrot.slane %v539, %v545
        %v548 = vshll.u32 %v546, 16
        %v550 = vrot.slane %v548, 5
        %551 = vrot.lane.b32.xlu0 %v550, 121
        %v552 = vpop.permute.xlu0 %551
        %v554 = vld [vmem:[%s380] sm:$0x8]
        %v555 = vsel %vm374, %v552, %v554
        %556 = vst [vmem:[%s380] sm:$0x8] %v555
        %v557 = vld [vmem:[%s1] sm:$0x3]
        %v558 = vld [vmem:[#allocation2] sm:$0xf]
        %s559 = scalar_lea.vmem %s1, 2
        %v560 = vld [vmem:[%s559] sm:$0x3]
        %v561 = vld [vmem:[%s380] sm:$0xf]
        %vm562 = vcmask 64512
        %v564 = vsel %vm562, %v560, 0
        %vm566 = vcmask 1043456
        %v568 = vsel %vm566, %v561, 0
        %570 = vmatprep.subr.bf16.mxu0 0
        %571 = vmatpush1.bf16.msra.mxu0 %v568
        %572 = vmatprep.subr.bf16.mxu0 0
        %573 = vmatpush1.bf16.msra.mxu0 0
        %574 = vmatprep.subr.bf16.mxu0 0
        %575 = vmatpush1.bf16.msra.mxu0 0
        %576 = vmatprep.subr.bf16.mxu0 0
        %577 = vmatpush1.bf16.msra.mxu0 0
        %578 = vmatprep.subr.bf16.mxu0 0
        %579 = vmatpush1.bf16.msra.mxu0 0
        %580 = vmatprep.subr.bf16.mxu0 0
        %581 = vmatpush1.bf16.msra.mxu0 0
        %582 = vmatprep.subr.bf16.mxu0 0
        %583 = vmatpush1.bf16.msra.mxu0 0
        %584 = vmatprep.subr.bf16.mxu0 0
        %585 = vmatpush1.bf16.msra.mxu0 0
        %586 = vmatprep.subr.bf16.mxu0 0
        %587 = vmatpush1.bf16.msra.mxu0 0
        %588 = vmatprep.subr.bf16.mxu0 0
        %589 = vmatpush1.bf16.msra.mxu0 0
        %590 = vmatprep.subr.bf16.mxu0 0
        %591 = vmatpush1.bf16.msra.mxu0 0
        %592 = vmatprep.subr.bf16.mxu0 0
        %593 = vmatpush1.bf16.msra.mxu0 0
        %594 = vmatprep.subr.bf16.mxu0 0
        %595 = vmatpush1.bf16.msra.mxu0 0
        %596 = vmatprep.subr.bf16.mxu0 0
        %597 = vmatpush1.bf16.msra.mxu0 0
        %598 = vmatprep.subr.bf16.mxu0 0
        %599 = vmatpush1.bf16.msra.mxu0 0
        %600 = vmatprep.subr.bf16.mxu0 0
        %601 = vmatpush1.bf16.msra.mxu0 0
        %602 = vmatprep.mubr.bf16.mxu0 0
        %603 = vmatmul.mubr.bf16.gmra.mrb[0].mxu0 %v564
        %v604 = vpop.f32.mrb[0].mxu0
        %v605 = vadd.f32 0.0, %v604
        %v606 = vpop.f32.mrb[0].mxu0
        %v607 = vpop.f32.mrb[0].mxu0
        %v608 = vpop.f32.mrb[0].mxu0
        %609 = vdwg.mxu0
        %v611 = vsel %vm562, %v557, 0
        %v614 = vsel %vm566, %v558, 0
        %616 = vmatprep.subr.bf16.mxu0 0
        %617 = vmatpush1.bf16.msra.mxu0 %v614
        %618 = vmatprep.subr.bf16.mxu0 0
        %619 = vmatpush1.bf16.msra.mxu0 0
        %620 = vmatprep.subr.bf16.mxu0 0
        %621 = vmatpush1.bf16.msra.mxu0 0
        %622 = vmatprep.subr.bf16.mxu0 0
        %623 = vmatpush1.bf16.msra.mxu0 0
        %624 = vmatprep.subr.bf16.mxu0 0
        %625 = vmatpush1.bf16.msra.mxu0 0
        %626 = vmatprep.subr.bf16.mxu0 0
        %627 = vmatpush1.bf16.msra.mxu0 0
        %628 = vmatprep.subr.bf16.mxu0 0
        %629 = vmatpush1.bf16.msra.mxu0 0
        %630 = vmatprep.subr.bf16.mxu0 0
        %631 = vmatpush1.bf16.msra.mxu0 0
        %632 = vmatprep.subr.bf16.mxu0 0
        %633 = vmatpush1.bf16.msra.mxu0 0
        %634 = vmatprep.subr.bf16.mxu0 0
        %635 = vmatpush1.bf16.msra.mxu0 0
        %636 = vmatprep.subr.bf16.mxu0 0
        %637 = vmatpush1.bf16.msra.mxu0 0
        %638 = vmatprep.subr.bf16.mxu0 0
        %639 = vmatpush1.bf16.msra.mxu0 0
        %640 = vmatprep.subr.bf16.mxu0 0
        %641 = vmatpush1.bf16.msra.mxu0 0
        %642 = vmatprep.subr.bf16.mxu0 0
        %643 = vmatpush1.bf16.msra.mxu0 0
        %644 = vmatprep.subr.bf16.mxu0 0
        %645 = vmatpush1.bf16.msra.mxu0 0
        %646 = vmatprep.subr.bf16.mxu0 0
        %647 = vmatpush1.bf16.msra.mxu0 0
        %648 = vmatprep.mubr.bf16.mxu0 0
        %649 = vmatmul.mubr.bf16.gmra.mrb[0].mxu0 %v611
        %v650 = vpop.f32.mrb[0].mxu0
        %v651 = vadd.f32 %v605, %v650
        %v652 = vpop.f32.mrb[0].mxu0
        %v653 = vpop.f32.mrb[0].mxu0
        %v654 = vpop.f32.mrb[0].mxu0
        %655 = vdwg.mxu0
        %v656 = vld [vmem:[%s2] sm:$0xf]
        %658 = vset.pattern.permute.xlu0 0
        %659 = vperm.xlu0 %658, %v656
        %v660 = vpop.permute.xlu0 %659
        %v662 = vadd.f32 %v651, %v660
        %vm663 = vcmp.gt.f32.partialorder %v662, 0.0
        %v664 = vmul.f32 %v662, 0.2
        %v665 = vsel %vm663, %v662, %v664
        %v666 = vpack.c.bf16 %v665, %v665
        %vm667 = vcmask 254976
        %668 = vst.msk [vmem:[%s175] sm:$0x3] %vm667, %v666
        %s669 = sand.u32 %s107, 1
        %s670 = scalar_lea.sflag [#allocation4], %s669
        %s671 = sand.u32 %s107, 1
        %s672 = smul.addr %s671, 2
        %s673 = scalar_lea.vmem [#allocation3], %s672
        // Predicated region
        $region33: #{tpu_custom_call.1} parent=31 // pred_check
          %p674 = pneg %p117
        $region34: #{tpu_custom_call.1} parent=31 // pred_check_branch
          %676 = sbr.rel (%p674) target = $region36
        $region35: #{tpu_custom_call.1} parent=31 // pred_region
          %s678 = ssub.s32 32, 32
          %679 = vsyncadd %s670, %s678
          %s680 = sadd.s32 %s22, %s21
          %s681 = smul.addr %s680, 32
          %s682 = scalar_lea.hbm %s3, %s681
          %s684 = sshll.u32 %s673, 4
          %s685 = int_to_ptr.vmem [resolvable:$true] %s684
          %687 = dma.vmem_to_hbm [thread:$0]  %s685, 32, %s682, %s670
        $region36: #{tpu_custom_call.1} parent=31 // pred_fallthru
          _
      $region32: #{tpu_custom_call.1} parent=5 // pred_fallthru
        _
      %p688 = scmp.le.s32.totalorder 2, %s12
      // Predicated region
      $region37: #{tpu_custom_call.1} parent=5 // pred_check
        %p689 = pneg %p688
      $region38: #{tpu_custom_call.1} parent=5 // pred_check_branch
        %691 = sbr.rel (%p689) target = $region40
      $region39: #{tpu_custom_call.1} parent=5 // pred_region
        %s692 = ssub.s32 %s12, 2
        // Predicated region
        $region41: #{tpu_custom_call.1} parent=39 // pred_check
          %p693 = pneg %p123
        $region42: #{tpu_custom_call.1} parent=39 // pred_check_branch
          %695 = sbr.rel (%p693) target = $region44
        $region43: #{tpu_custom_call.1} parent=39 // pred_region
          %s696 = sand.u32 %s108, 1
          %s697 = scalar_lea.sflag [#allocation4], %s696
          %s698 = sand.u32 %s108, 1
          %s699 = smul.addr %s698, 2
          %s700 = scalar_lea.vmem [#allocation3], %s699
          %701 = dma.done %s697, 32
        $region44: #{tpu_custom_call.1} parent=39 // pred_fallthru
          _
      $region40: #{tpu_custom_call.1} parent=5 // pred_fallthru
        _
    $region6: #{tpu_custom_call.1} parent=1 // loop_footer
      %s16 = sadd.s32 1, %s12
    $region7: #{tpu_custom_call.1} parent=1 // loop_footer_branch
      %11 = sbr.rel target = $region3
    $region8: #{tpu_custom_call.1} parent=1 // loop_exit
      _
    %702 = vsyncpa [#allocation4], 1
    %s703 = scalar_lea.sflag [#allocation4], 1
    %704 = vsyncpa %s703, 1

</llo_original>
